<compile_context>
chip_gen: v5e
topology: v5e:2x2
jax: 0.10.0
libtpu: 0.0.40
codegen_flags: <defaults>
</compile_context>

<pallas_src>
import numpy as np
import jax
import jax.numpy as jnp
from jax import lax
from jax.experimental import pallas as pl
from jax.experimental.pallas import tpu as pltpu


def _mean_kernel(x_ref, o_ref):
    img = x_ref[...]                                   # (Bb, R, T) float32
    Bb, R, T = img.shape
    f32 = jnp.float32

    # Column enabled mask: a column is disabled iff its sum over rows == 0.0.
    col_sum = jnp.sum(img, axis=1)                     # (Bb, T)
    enabled = col_sum != 0.0                           # (Bb, T) bool
    en_f = enabled.astype(f32)                         # (Bb, T)

    # --- nearest-enabled-neighbor search on index tensors only (no (R,T) work) ---
    # off_left[j, m]  = circular steps forward  (j -> j+1 -> ...) from j to m.
    # off_right[j, m] = circular steps backward (j -> j-1 -> ...) from j to m.
    j_tt = lax.broadcasted_iota(jnp.int32, (T, T), 0)
    m_tt = lax.broadcasted_iota(jnp.int32, (T, T), 1)
    off_left = jnp.mod(m_tt - j_tt, T).astype(f32)     # (T, T)
    off_right = jnp.mod(j_tt - m_tt, T).astype(f32)    # (T, T)

    # Disabled candidate columns contribute the PyTorch fallback offset T-1.
    en_m = enabled[:, None, :]                         # (Bb, 1, T) over source m
    fallback = jnp.asarray(T - 1, dtype=f32)
    cand_l = jnp.where(en_m, off_left[None], fallback)     # (Bb, T, T)
    cand_r = jnp.where(en_m, off_right[None], fallback)    # (Bb, T, T)
    left_off = jnp.min(cand_l, axis=2).astype(jnp.int32)   # (Bb, T)
    right_off = jnp.min(cand_r, axis=2).astype(jnp.int32)  # (Bb, T)

    jcol = lax.broadcasted_iota(jnp.int32, (Bb, T), 1)
    left_idx = jnp.mod(jcol + left_off, T)             # (Bb, T)
    right_idx = jnp.mod(jcol - right_off, T)           # (Bb, T)

    # --- mixing matrix M[b, m, j]: out[:, j] = sum_m img[:, m] * M[m, j] ---
    m_iota = lax.broadcasted_iota(jnp.int32, (Bb, T, T), 1)
    j_iota = lax.broadcasted_iota(jnp.int32, (Bb, T, T), 2)
    oh_self = (m_iota == j_iota).astype(f32)
    oh_left = (m_iota == left_idx[:, None, :]).astype(f32)
    oh_right = (m_iota == right_idx[:, None, :]).astype(f32)
    en_j = en_f[:, None, :]                            # (Bb, 1, T) over target j
    mix = en_j * oh_self + (1.0 - en_j) * 0.5 * (oh_left + oh_right)

    # Single batched MXU matmul does the whole gather/average/select.
    out = jnp.einsum('brm,bmj->brj', img, mix,
                     preferred_element_type=jnp.float32)
    o_ref[...] = out.astype(o_ref.dtype)


def mean_model_forward(x, tof_count, block_batch=None):
    """x: (B, R, T) float32 with T == tof_count. Returns (B, R*T)."""
    B, R, T = x.shape
    assert T == tof_count

    if block_batch is None:
        bytes_per_image = R * T * x.dtype.itemsize
        # Keep the double-buffered in+out blocks (4 buffers) at <= ~4 MiB total
        # so we stay far inside the 32 MiB VMEM limit on every TPU generation.
        bb = max(1, min(B, (4 * 1024 * 1024) // max(1, 4 * bytes_per_image)))
        # Prefer >= 2 grid steps so v7x's two TensorCores both get work.
        if bb >= B and B >= 2:
            bb = max(1, B // 2)
        while B % bb != 0:
            bb -= 1
        block_batch = bb
    Bb = block_batch
    assert B % Bb == 0

    out = pl.pallas_call(
        _mean_kernel,
        out_shape=jax.ShapeDtypeStruct((B, R, T), x.dtype),
        grid_spec=pltpu.PrefetchScalarGridSpec(
            num_scalar_prefetch=0,
            grid=(B // Bb,),
            in_specs=[pl.BlockSpec((Bb, R, T), lambda b: (b, 0, 0))],
            out_specs=pl.BlockSpec((Bb, R, T), lambda b: (b, 0, 0)),
        ),
        compiler_params=pltpu.CompilerParams(
            dimension_semantics=("parallel",),
            vmem_limit_bytes=32 * 1024 * 1024,
        ),
    )(x)
    # Row-major per-image flatten is a free metadata reshape outside the kernel.
    return out.reshape(B, R * T)


def _ref_mean_model(x_np, tof_count):
    B = x_np.shape[0]
    outs = []
    for b in range(B):
        img = x_np[b].reshape(-1, tof_count).copy()
        T = tof_count
        disabled = np.arange(T)[img.sum(axis=0) == 0.0]
        dset = set(int(d) for d in disabled)
        for d in disabled:
            left = right = int(d)
            for i in range(T):
                left = (int(d) + i) % T
                if left not in dset:
                    break
            for i in range(T):
                right = (int(d) - i) % T
                if right not in dset:
                    break
            img[:, d] = (img[:, left] + img[:, right]) / 2
        outs.append(img.flatten())
    return np.stack(outs, axis=0)


if __name__ == "__main__":
    B, R, T = 4, 8, 8          # batch, rows, tof_count
    key = jax.random.PRNGKey(0)
    x = jax.random.normal(key, (B, R, T), dtype=jnp.float32)
    # Disable a few ToF columns (sum over rows == 0), incl. a wrap-around case.
    x = x.at[0, :, 2].set(0.0)
    x = x.at[0, :, 3].set(0.0)
    x = x.at[1, :, 7].set(0.0)
    x = x.at[2, :, 0].set(0.0)
    # image 3 has no disabled columns.

    out = mean_model_forward(x, tof_count=T)
    out = jax.block_until_ready(out)

    ref = _ref_mean_model(np.asarray(x), tof_count=T)
    np.testing.assert_allclose(np.asarray(out), ref, rtol=1e-5, atol=1e-5)
    print("KERNEL_OK")
</pallas_src>

<mosaic_0001>
module attributes {stable_mosaic.version = 11 : i64} {
  func.func @_mean_kernel(%arg0: i32, %arg1: memref<2x8x8xf32, #tpu.memory_space<vmem>>, %arg2: memref<2x8x8xf32, #tpu.memory_space<vmem>>) attributes {dimension_semantics = [#tpu.dimension_semantics<parallel>], iteration_bounds = array<i64: 2>, scalar_prefetch = 0 : i64, scratch_operands = 0 : i64, tpu.core_type = #tpu.core_type<tc>, window_params = [{transform_indices = @transform_0, window_bounds = array<i64: 2, 8, 8>}, {transform_indices = @transform_1, window_bounds = array<i64: 2, 8, 8>}]} {
    %c0 = arith.constant 0 : index
    %c0_0 = arith.constant 0 : index
    %c0_1 = arith.constant 0 : index
    %0 = vector.load %arg1[%c0, %c0_0, %c0_1] : memref<2x8x8xf32, #tpu.memory_space<vmem>>, vector<2x8x8xf32>
    %cst = arith.constant dense<0.000000e+00> : vector<2x8xf32>
    %1 = vector.multi_reduction <add>, %0, %cst [1] : vector<2x8x8xf32> to vector<2x8xf32>
    %cst_2 = arith.constant 0.000000e+00 : f32
    %2 = vector.broadcast %cst_2 : f32 to vector<2x8xf32>
    %3 = arith.cmpf one, %1, %2 : vector<2x8xf32>
    %4 = arith.extui %3 : vector<2x8xi1> to vector<2x8xi32>
    %5 = arith.sitofp %4 : vector<2x8xi32> to vector<2x8xf32>
    %6 = tpu.iota {dimensions = array<i32: 0>} : vector<8x8xi32>
    %7 = tpu.iota {dimensions = array<i32: 1>} : vector<8x8xi32>
    %8 = arith.subi %7, %6 : vector<8x8xi32>
    %c8_i32 = arith.constant 8 : i32
    %c0_i32 = arith.constant 0 : i32
    %9 = arith.cmpi eq, %c8_i32, %c0_i32 : i32
    %c1_i32 = arith.constant 1 : i32
    %10 = arith.select %9, %c1_i32, %c8_i32 : i32
    %11 = vector.broadcast %10 : i32 to vector<8x8xi32>
    %12 = arith.remsi %8, %11 : vector<8x8xi32>
    %c0_i32_3 = arith.constant 0 : i32
    %13 = vector.broadcast %c0_i32_3 : i32 to vector<8x8xi32>
    %14 = arith.cmpi ne, %12, %13 : vector<8x8xi32>
    %c0_i32_4 = arith.constant 0 : i32
    %15 = vector.broadcast %c0_i32_4 : i32 to vector<8x8xi32>
    %16 = arith.cmpi slt, %12, %15 : vector<8x8xi32>
    %c0_i32_5 = arith.constant 0 : i32
    %17 = arith.cmpi slt, %10, %c0_i32_5 : i32
    %18 = vector.broadcast %17 : i1 to vector<8x8xi1>
    %19 = vector.broadcast %18 : vector<8x8xi1> to vector<8x8xi1>
    %20 = arith.xori %16, %19 : vector<8x8xi1>
    %21 = arith.andi %20, %14 : vector<8x8xi1>
    %22 = vector.broadcast %10 : i32 to vector<8x8xi32>
    %23 = arith.addi %12, %22 : vector<8x8xi32>
    %24 = arith.select %21, %23, %12 : vector<8x8xi1>, vector<8x8xi32>
    %25 = arith.sitofp %24 : vector<8x8xi32> to vector<8x8xf32>
    %26 = arith.subi %6, %7 : vector<8x8xi32>
    %c8_i32_6 = arith.constant 8 : i32
    %c0_i32_7 = arith.constant 0 : i32
    %27 = arith.cmpi eq, %c8_i32_6, %c0_i32_7 : i32
    %c1_i32_8 = arith.constant 1 : i32
    %28 = arith.select %27, %c1_i32_8, %c8_i32_6 : i32
    %29 = vector.broadcast %28 : i32 to vector<8x8xi32>
    %30 = arith.remsi %26, %29 : vector<8x8xi32>
    %c0_i32_9 = arith.constant 0 : i32
    %31 = vector.broadcast %c0_i32_9 : i32 to vector<8x8xi32>
    %32 = arith.cmpi ne, %30, %31 : vector<8x8xi32>
    %c0_i32_10 = arith.constant 0 : i32
    %33 = vector.broadcast %c0_i32_10 : i32 to vector<8x8xi32>
    %34 = arith.cmpi slt, %30, %33 : vector<8x8xi32>
    %c0_i32_11 = arith.constant 0 : i32
    %35 = arith.cmpi slt, %28, %c0_i32_11 : i32
    %36 = vector.broadcast %35 : i1 to vector<8x8xi1>
    %37 = vector.broadcast %36 : vector<8x8xi1> to vector<8x8xi1>
    %38 = arith.xori %34, %37 : vector<8x8xi1>
    %39 = arith.andi %38, %32 : vector<8x8xi1>
    %40 = vector.broadcast %28 : i32 to vector<8x8xi32>
    %41 = arith.addi %30, %40 : vector<8x8xi32>
    %42 = arith.select %39, %41, %30 : vector<8x8xi1>, vector<8x8xi32>
    %43 = arith.sitofp %42 : vector<8x8xi32> to vector<8x8xf32>
    %44 = vector.shape_cast %3 : vector<2x8xi1> to vector<2x1x8xi1>
    %45 = vector.shape_cast %25 : vector<8x8xf32> to vector<1x8x8xf32>
    %cst_12 = arith.constant 7.000000e+00 : f32
    %46 = vector.shape_cast %44 : vector<2x1x8xi1> to vector<2x1x8xi1>
    %47 = vector.broadcast %46 : vector<2x1x8xi1> to vector<2x8x8xi1>
    %48 = vector.shape_cast %45 : vector<1x8x8xf32> to vector<1x8x8xf32>
    %49 = vector.broadcast %48 : vector<1x8x8xf32> to vector<2x8x8xf32>
    %50 = vector.broadcast %cst_12 : f32 to vector<2x8x8xf32>
    %51 = arith.select %47, %49, %50 : vector<2x8x8xi1>, vector<2x8x8xf32>
    %52 = vector.shape_cast %43 : vector<8x8xf32> to vector<1x8x8xf32>
    %cst_13 = arith.constant 7.000000e+00 : f32
    %53 = vector.shape_cast %44 : vector<2x1x8xi1> to vector<2x1x8xi1>
    %54 = vector.broadcast %53 : vector<2x1x8xi1> to vector<2x8x8xi1>
    %55 = vector.shape_cast %52 : vector<1x8x8xf32> to vector<1x8x8xf32>
    %56 = vector.broadcast %55 : vector<1x8x8xf32> to vector<2x8x8xf32>
    %57 = vector.broadcast %cst_13 : f32 to vector<2x8x8xf32>
    %58 = arith.select %54, %56, %57 : vector<2x8x8xi1>, vector<2x8x8xf32>
    %cst_14 = arith.constant dense<0x7F800000> : vector<2x8xf32>
    %59 = vector.multi_reduction <minimumf>, %51, %cst_14 [2] : vector<2x8x8xf32> to vector<2x8xf32>
    %60 = arith.fptosi %59 : vector<2x8xf32> to vector<2x8xi32>
    %cst_15 = arith.constant dense<0x7F800000> : vector<2x8xf32>
    %61 = vector.multi_reduction <minimumf>, %58, %cst_15 [2] : vector<2x8x8xf32> to vector<2x8xf32>
    %62 = arith.fptosi %61 : vector<2x8xf32> to vector<2x8xi32>
    %63 = tpu.iota {dimensions = array<i32: 1>} : vector<2x8xi32>
    %64 = arith.addi %63, %60 : vector<2x8xi32>
    %c8_i32_16 = arith.constant 8 : i32
    %c0_i32_17 = arith.constant 0 : i32
    %65 = arith.cmpi eq, %c8_i32_16, %c0_i32_17 : i32
    %c1_i32_18 = arith.constant 1 : i32
    %66 = arith.select %65, %c1_i32_18, %c8_i32_16 : i32
    %67 = vector.broadcast %66 : i32 to vector<2x8xi32>
    %68 = arith.remsi %64, %67 : vector<2x8xi32>
    %c0_i32_19 = arith.constant 0 : i32
    %69 = vector.broadcast %c0_i32_19 : i32 to vector<2x8xi32>
    %70 = arith.cmpi ne, %68, %69 : vector<2x8xi32>
    %c0_i32_20 = arith.constant 0 : i32
    %71 = vector.broadcast %c0_i32_20 : i32 to vector<2x8xi32>
    %72 = arith.cmpi slt, %68, %71 : vector<2x8xi32>
    %c0_i32_21 = arith.constant 0 : i32
    %73 = arith.cmpi slt, %66, %c0_i32_21 : i32
    %74 = vector.broadcast %73 : i1 to vector<2x8xi1>
    %75 = vector.broadcast %74 : vector<2x8xi1> to vector<2x8xi1>
    %76 = arith.xori %72, %75 : vector<2x8xi1>
    %77 = arith.andi %76, %70 : vector<2x8xi1>
    %78 = vector.broadcast %66 : i32 to vector<2x8xi32>
    %79 = arith.addi %68, %78 : vector<2x8xi32>
    %80 = arith.select %77, %79, %68 : vector<2x8xi1>, vector<2x8xi32>
    %81 = arith.subi %63, %62 : vector<2x8xi32>
    %c8_i32_22 = arith.constant 8 : i32
    %c0_i32_23 = arith.constant 0 : i32
    %82 = arith.cmpi eq, %c8_i32_22, %c0_i32_23 : i32
    %c1_i32_24 = arith.constant 1 : i32
    %83 = arith.select %82, %c1_i32_24, %c8_i32_22 : i32
    %84 = vector.broadcast %83 : i32 to vector<2x8xi32>
    %85 = arith.remsi %81, %84 : vector<2x8xi32>
    %c0_i32_25 = arith.constant 0 : i32
    %86 = vector.broadcast %c0_i32_25 : i32 to vector<2x8xi32>
    %87 = arith.cmpi ne, %85, %86 : vector<2x8xi32>
    %c0_i32_26 = arith.constant 0 : i32
    %88 = vector.broadcast %c0_i32_26 : i32 to vector<2x8xi32>
    %89 = arith.cmpi slt, %85, %88 : vector<2x8xi32>
    %c0_i32_27 = arith.constant 0 : i32
    %90 = arith.cmpi slt, %83, %c0_i32_27 : i32
    %91 = vector.broadcast %90 : i1 to vector<2x8xi1>
    %92 = vector.broadcast %91 : vector<2x8xi1> to vector<2x8xi1>
    %93 = arith.xori %89, %92 : vector<2x8xi1>
    %94 = arith.andi %93, %87 : vector<2x8xi1>
    %95 = vector.broadcast %83 : i32 to vector<2x8xi32>
    %96 = arith.addi %85, %95 : vector<2x8xi32>
    %97 = arith.select %94, %96, %85 : vector<2x8xi1>, vector<2x8xi32>
    %98 = tpu.iota {dimensions = array<i32: 1>} : vector<2x8x8xi32>
    %99 = tpu.iota {dimensions = array<i32: 2>} : vector<2x8x8xi32>
    %100 = arith.cmpi eq, %98, %99 : vector<2x8x8xi32>
    %101 = arith.extui %100 : vector<2x8x8xi1> to vector<2x8x8xi32>
    %102 = arith.sitofp %101 : vector<2x8x8xi32> to vector<2x8x8xf32>
    %103 = vector.shape_cast %80 : vector<2x8xi32> to vector<2x1x8xi32>
    %104 = vector.broadcast %103 : vector<2x1x8xi32> to vector<2x8x8xi32>
    %105 = arith.cmpi eq, %98, %104 : vector<2x8x8xi32>
    %106 = arith.extui %105 : vector<2x8x8xi1> to vector<2x8x8xi32>
    %107 = arith.sitofp %106 : vector<2x8x8xi32> to vector<2x8x8xf32>
    %108 = vector.shape_cast %97 : vector<2x8xi32> to vector<2x1x8xi32>
    %109 = vector.broadcast %108 : vector<2x1x8xi32> to vector<2x8x8xi32>
    %110 = arith.cmpi eq, %98, %109 : vector<2x8x8xi32>
    %111 = arith.extui %110 : vector<2x8x8xi1> to vector<2x8x8xi32>
    %112 = arith.sitofp %111 : vector<2x8x8xi32> to vector<2x8x8xf32>
    %113 = vector.shape_cast %5 : vector<2x8xf32> to vector<2x1x8xf32>
    %114 = vector.broadcast %113 : vector<2x1x8xf32> to vector<2x8x8xf32>
    %115 = arith.mulf %114, %102 : vector<2x8x8xf32>
    %cst_28 = arith.constant 1.000000e+00 : f32
    %116 = vector.broadcast %cst_28 : f32 to vector<2x1x8xf32>
    %117 = arith.subf %116, %113 : vector<2x1x8xf32>
    %cst_29 = arith.constant 5.000000e-01 : f32
    %118 = vector.broadcast %cst_29 : f32 to vector<2x1x8xf32>
    %119 = arith.mulf %117, %118 : vector<2x1x8xf32>
    %120 = arith.addf %107, %112 : vector<2x8x8xf32>
    %121 = vector.broadcast %119 : vector<2x1x8xf32> to vector<2x8x8xf32>
    %122 = arith.mulf %121, %120 : vector<2x8x8xf32>
    %123 = arith.addf %115, %122 : vector<2x8x8xf32>
    "tpu.trace_start"() <{level = 10 : i32, message = "brm,bmj->brj"}> : () -> ()
    %cst_30 = arith.constant dense<0.000000e+00> : vector<2x8x8xf32>
    %124 = tpu.matmul %0, %123, %cst_30 {dimension_numbers = #tpu.dot_dimension_numbers<[2], [1], [1], [2], [0, 0, 0, 1, 1, 2], [0], [0]>} : vector<2x8x8xf32>, vector<2x8x8xf32>, vector<2x8x8xf32> -> vector<2x8x8xf32>
    "tpu.trace_stop"() : () -> ()
    %c0_31 = arith.constant 0 : index
    %c0_32 = arith.constant 0 : index
    %c0_33 = arith.constant 0 : index
    %125 = vector.load %arg2[%c0_31, %c0_32, %c0_33] : memref<2x8x8xf32, #tpu.memory_space<vmem>>, vector<2x8x8xf32>
    tpu.vector_store %arg2[%c0_31, %c0_32, %c0_33], %124 {strides = array<i32>} : memref<2x8x8xf32, #tpu.memory_space<vmem>>, vector<2x8x8xf32>,
    return
  }
  func.func @transform_0(%arg0: i32) -> (i32, i32, i32) {
    %c0_i32 = arith.constant 0 : i32
    %c0_i32_0 = arith.constant 0 : i32
    %c0_i32_1 = arith.constant 0 : i32
    return %arg0, %c0_i32, %c0_i32_0 : i32, i32, i32
  }
  func.func @transform_1(%arg0: i32) -> (i32, i32, i32) {
    %c0_i32 = arith.constant 0 : i32
    %c0_i32_0 = arith.constant 0 : i32
    %c0_i32_1 = arith.constant 0 : i32
    return %arg0, %c0_i32, %c0_i32_0 : i32, i32, i32
  }
}

</mosaic_0001>

<llo_original>
// kernel: tpu_custom_call.1
$region0: #{tpu_custom_call.1}
  #allocation0 [shape = 'u32[]', space=smem, size = 0x4, offset = 0x4, fixed_abs, tag = 'smem constant byte address 0x4 - core index']
  #allocation1 [shape = 'u32[72,128]{1,0:T(1,128)}', space=vmem, size = 0x9000, scoped, tag = 'internal scratch']
  %s0 = inlined_call_operand.hbm [shape: f32[4,8,8], index: 0, kind: input, shape index: {}]
  %s1 = inlined_call_operand.hbm [shape: f32[4,8,8], index: 1, kind: output, shape index: {}]
  %s2 = sld [smem:[#allocation0]]
  $region41: #{tpu_custom_call.1} parent=0
    _
  %s4 = ssub.s32 1, %s2
  %s5 = scalar_select 0, %s4, %s2
  $region1: #{tpu_custom_call.1} parent=0
    #allocation2 [shape = 'u8[16384]{0}', space=vmem, size = 0x4000, scoped, tag = 'input window, operand 0']
    #allocation3 [shape = 's32[2]{0}', space=sflag, size = 0x8, scoped, tag = 'scoped memory for tpu_custom_call.1']
    #allocation4 [shape = 's32[2]{0}', space=sflag, size = 0x8, scoped, tag = 'scoped memory for tpu_custom_call.1']
    #allocation5 [shape = 'u8[16384]{0}', space=vmem, size = 0x4000, scoped, tag = 'output window, operand 0']
    %6 = vsyncpa [#allocation3], 0
    %s7 = scalar_lea.sflag [#allocation3], 1
    %8 = vsyncpa %s7, 0
    %9 = vsyncpa [#allocation4], 0
    %s10 = scalar_lea.sflag [#allocation4], 1
    %11 = vsyncpa %s10, 0
    loop: start=0, step=1, limit=4
    $region2: #{tpu_custom_call.1} parent=1 // loop_pre_header
      _
    $region3: #{tpu_custom_call.1} parent=1 // loop_header
      %s13 = sphi 0, %s17
      %p14 = scmp.ge.s32.totalorder %s13, 4
      %s23 = sphi 0, %s25
      %s26 = sphi 0, %s23
      %s27 = sphi 0, %s26
      %s43 = sphi 0, %s27
      %s49 = sphi 0, %s51
      %s52 = sphi 0, %s49
      %s53 = sphi 0, %s52
      %s69 = sphi 0, %s53
    $region4: #{tpu_custom_call.1} parent=1 // loop_header_branch
      %16 = sbr.rel (%p14) target = $region8
    $region5: #{tpu_custom_call.1} parent=1 // loop_body
      %s18 = ssub.s32 %s13, 1
      %s19 = ssub.s32 %s13, 2
      %s20 = sadd.s32 %s13, 1
      %s21 = ssub.s32 %s13, %s20
      %p22 = scmp.eq.s32.totalorder %s21, 0
      %s24 = sadd.s32 %s23, 1
      %s25 = scalar_select %p22, %s23, %s24
      %p28 = pneg %p22
      %p29 = scmp.eq.s32.totalorder %s13, 1
      %p30 = por %p28, %p29
      %p31 = scmp.ne.s32.totalorder %s23, %s26
      %p32 = scmp.eq.s32.totalorder %s13, 0
      %p33 = por %p31, %p32
      %p34 = scmp.ne.s32.totalorder %s23, %s26
      %p35 = scmp.eq.s32.totalorder %s18, 1
      %p36 = por %p34, %p35
      %p37 = scmp.ne.s32.totalorder %s26, %s27
      %p38 = scmp.eq.s32.totalorder %s18, 0
      %p39 = por %p37, %p38
      %p40 = scmp.ne.s32.totalorder %s26, %s27
      %p41 = scmp.eq.s32.totalorder %s19, 1
      %p42 = por %p40, %p41
      %p44 = scmp.ne.s32.totalorder %s27, %s43
      %p45 = scmp.eq.s32.totalorder %s19, 0
      %p46 = por %p44, %p45
      %s47 = ssub.s32 %s13, %s20
      %p48 = scmp.eq.s32.totalorder %s47, 0
      %s50 = sadd.s32 %s49, 1
      %s51 = scalar_select %p48, %s49, %s50
      %p54 = pneg %p48
      %p55 = scmp.eq.s32.totalorder %s13, 1
      %p56 = por %p54, %p55
      %p57 = scmp.ne.s32.totalorder %s49, %s52
      %p58 = scmp.eq.s32.totalorder %s13, 0
      %p59 = por %p57, %p58
      %p60 = scmp.ne.s32.totalorder %s49, %s52
      %p61 = scmp.eq.s32.totalorder %s18, 1
      %p62 = por %p60, %p61
      %p63 = scmp.ne.s32.totalorder %s52, %s53
      %p64 = scmp.eq.s32.totalorder %s18, 0
      %p65 = por %p63, %p64
      %p66 = scmp.ne.s32.totalorder %s52, %s53
      %p67 = scmp.eq.s32.totalorder %s19, 1
      %p68 = por %p66, %p67
      %p70 = scmp.ne.s32.totalorder %s53, %s69
      %p71 = scmp.eq.s32.totalorder %s19, 0
      %p72 = por %p70, %p71
      %p73 = scmp.le.s32.totalorder 1, %s13
      %p74 = scmp.lt.s32.totalorder %s13, 3
      %p75 = pnand %p73, %p74
      %p76 = pneg %p75
      // Predicated region
      $region9: #{tpu_custom_call.1} parent=5 // pred_check
        _
      $region10: #{tpu_custom_call.1} parent=5 // pred_check_branch
        %78 = sbr.rel (%p75) target = $region12
      $region11: #{tpu_custom_call.1} parent=5 // pred_region
        %s79 = ssub.s32 %s13, 1
      $region12: #{tpu_custom_call.1} parent=5 // pred_fallthru
        _
      %p80 = scmp.lt.s32.totalorder %s13, 2
      // Predicated region
      $region13: #{tpu_custom_call.1} parent=5 // pred_check
        %p81 = pneg %p80
      $region14: #{tpu_custom_call.1} parent=5 // pred_check_branch
        %83 = sbr.rel (%p81) target = $region16
      $region15: #{tpu_custom_call.1} parent=5 // pred_region
        // Predicated region
        $region17: #{tpu_custom_call.1} parent=15 // pred_check
          %p84 = pneg %p33
        $region18: #{tpu_custom_call.1} parent=15 // pred_check_branch
          %86 = sbr.rel (%p84) target = $region20
        $region19: #{tpu_custom_call.1} parent=15 // pred_region
          %s87 = sand.u32 %s23, 1
          %s88 = scalar_lea.sflag [#allocation3], %s87
          %s89 = sand.u32 %s23, 1
          %s90 = smul.addr %s89, 16
          %s91 = scalar_lea.vmem [#allocation2], %s90
          %s92 = smul.u32 2, %s13
          %94 = vsyncadd %s88, 0
          %s95 = smul.addr %s92, 8
          %s96 = scalar_lea.hbm %s0, %s95
          %s97 = sshll.u32 %s96, 4
          %s98 = int_to_ptr.hbm [resolvable:$true] %s97
          %s99 = sshll.u32 %s91, 4
          %s100 = int_to_ptr.vmem [resolvable:$true] %s99
          %105 = dma.hbm_to_vmem [thread:$0]  %s98, 256, %s100, %s88, 128, 128, 8
        $region20: #{tpu_custom_call.1} parent=15 // pred_fallthru
          _
      $region16: #{tpu_custom_call.1} parent=5 // pred_fallthru
        _
      %p106 = scmp.le.s32.totalorder 1, %s13
      %p107 = scmp.lt.s32.totalorder %s13, 3
      %p108 = pnand %p106, %p107
      %p109 = pneg %p108
      // Predicated region
      $region21: #{tpu_custom_call.1} parent=5 // pred_check
        _
      $region22: #{tpu_custom_call.1} parent=5 // pred_check_branch
        %111 = sbr.rel (%p108) target = $region24
      $region23: #{tpu_custom_call.1} parent=5 // pred_region
        %s112 = ssub.s32 %s13, 1
        %s113 = sand.u32 %s26, 1
        %s114 = scalar_lea.sflag [#allocation3], %s113
        %s115 = sand.u32 %s26, 1
        %s116 = smul.addr %s115, 16
        %s117 = scalar_lea.vmem [#allocation2], %s116
        // Predicated region
        $region25: #{tpu_custom_call.1} parent=23 // pred_check
          %p118 = pneg %p39
        $region26: #{tpu_custom_call.1} parent=23 // pred_check_branch
          %120 = sbr.rel (%p118) target = $region28
        $region27: #{tpu_custom_call.1} parent=23 // pred_region
          %122 = dma.done %s114, 256
        $region28: #{tpu_custom_call.1} parent=23 // pred_fallthru
          _
        %s123 = sand.u32 %s26, 1
        %s124 = scalar_lea.sflag [#allocation3], %s123
        %s125 = sand.u32 %s26, 1
        %s126 = smul.addr %s125, 16
        %s127 = scalar_lea.vmem [#allocation2], %s126
        %p128 = pneg %p39
        %p129 = pneg %p36
        %p130 = pneg %p65
        %p131 = pneg %p62
        %s132 = sand.u32 %s52, 1
        %s133 = scalar_lea.sflag [#allocation4], %s132
        %s134 = sand.u32 %s52, 1
        %s135 = smul.addr %s134, 16
        %s136 = scalar_lea.vmem [#allocation5], %s135
        %s137 = smul.u32 2, %s18
        %s138 = smul.u32 2, %s18
        %v139 = vld [vmem:[%s117] sm:$0xff]
        %v140 = vld [vmem:[%s117 + $0x8] sm:$0xff]
        %vm141 = vcmask 64512
        %v142 = vsel %vm141, %v139, 0.0
        %v143 = vrot.slane %v142, 4
        %v144 = vadd.f32 %v142, %v143
        %v145 = vrot.slane %v144, 2
        %v146 = vadd.f32 %v144, %v145
        %v147 = vrot.slane %v146, 1
        %v148 = vadd.f32 %v146, %v147
        %v149 = vsel %vm141, %v140, 0.0
        %v150 = vrot.slane %v149, 4
        %v151 = vadd.f32 %v149, %v150
        %v152 = vrot.slane %v151, 2
        %v153 = vadd.f32 %v151, %v152
        %v154 = vrot.slane %v153, 1
        %v155 = vadd.f32 %v153, %v154
        %vm156 = vcmp.ne.f32.partialorder %v148, 0.0
        %vm157 = vcmp.ne.f32.partialorder %v155, 0.0
        %v158 = vsel %vm156, 1, 0
        %v159 = vsel %vm157, 1, 0
        %v160 = vcvt.s32.f32 %v158
        %v161 = vcvt.s32.f32 %v159
        %v162 = vlaneseq
        %v163 = vshrl.u32 %v162, 7
        %v164 = vlaneseq
        %v165 = vand.u32 %v164, 127
        %v166 = vsub.s32 %v165, %v163
        %vm167 = vcmp.lt.s32.totalorder %v166, 0
        %v168 = vsub.s32 0, %v166
        %v169 = vsel %vm167, %v168, %v166
        %v170 = vshrl.u32 %v169, 3
        %v171 = vand.u32 %v169, 7
        %v172 = vsub.s32 0, %v171
        %v173 = vsel %vm167, %v172, %v171
        %vm174 = vcmp.ne.s32.totalorder %v173, 0
        %vm175 = vcmp.lt.s32.totalorder %v173, 0
        %vm176 = vmand %vm175, %vm174
        %v177 = vadd.s32 %v173, 8
        %v178 = vsel %vm176, %v177, %v173
        %v179 = vcvt.s32.f32 %v178
        %v180 = vsub.s32 %v163, %v165
        %vm181 = vcmp.lt.s32.totalorder %v180, 0
        %v182 = vsub.s32 0, %v180
        %v183 = vsel %vm181, %v182, %v180
        %v184 = vshrl.u32 %v183, 3
        %v185 = vand.u32 %v183, 7
        %v186 = vsub.s32 0, %v185
        %v187 = vsel %vm181, %v186, %v185
        %vm188 = vcmp.ne.s32.totalorder %v187, 0
        %vm189 = vcmp.lt.s32.totalorder %v187, 0
        %vm190 = vmand %vm189, %vm188
        %v191 = vadd.s32 %v187, 8
        %v192 = vsel %vm190, %v191, %v187
        %v193 = vcvt.s32.f32 %v192
        %vm194 = vcmp.eq.s32.totalorder %v158, 1
        %vm195 = vcmp.eq.s32.totalorder %v159, 1
        %v196 = vsel %vm194, %v179, 7.0
        %v197 = vsel %vm195, %v179, 7.0
        %v198 = vsel %vm194, %v193, 7.0
        %v199 = vsel %vm195, %v193, 7.0
        %v200 = vsel %vm141, %v196, inf
        %201 = vmin.xlane.f32.xlu0 %v200
        %v202 = vpop.xlane.xlu0 %201
        %v203 = vsel %vm141, %v197, inf
        %204 = vmin.xlane.f32.xlu0 %v203
        %v205 = vpop.xlane.xlu0 %204
        %v206 = vcvt.f32.s32.to.zero.pseudo %v202
        %v207 = vcvt.f32.s32.to.zero.pseudo %v205
        %v208 = vsel %vm141, %v198, inf
        %209 = vmin.xlane.f32.xlu0 %v208
        %v210 = vpop.xlane.xlu0 %209
        %v211 = vsel %vm141, %v199, inf
        %212 = vmin.xlane.f32.xlu0 %v211
        %v213 = vpop.xlane.xlu0 %212
        %v214 = vcvt.f32.s32.to.zero.pseudo %v210
        %v215 = vcvt.f32.s32.to.zero.pseudo %v213
        %v216 = vperm.slane %v206, %v165
        %v217 = vperm.slane %v207, %v165
        %vm218 = vcmask 1041409
        %v219 = vsel %vm218, %v217, %v216
        %v220 = vadd.s32 %v165, %v219
        %vm221 = vcmp.lt.s32.totalorder %v220, 0
        %v222 = vsub.s32 0, %v220
        %v223 = vsel %vm221, %v222, %v220
        %v224 = vshrl.u32 %v223, 3
        %v225 = vand.u32 %v223, 7
        %v226 = vsub.s32 0, %v225
        %v227 = vsel %vm221, %v226, %v225
        %vm228 = vcmp.ne.s32.totalorder %v227, 0
        %vm229 = vcmp.lt.s32.totalorder %v227, 0
        %vm230 = vmand %vm229, %vm228
        %v231 = vadd.s32 %v227, 8
        %v232 = vsel %vm230, %v231, %v227
        %v233 = vperm.slane %v214, %v165
        %v234 = vperm.slane %v215, %v165
        %v235 = vsel %vm218, %v234, %v233
        %v236 = vsub.s32 %v165, %v235
        %vm237 = vcmp.lt.s32.totalorder %v236, 0
        %v238 = vsub.s32 0, %v236
        %v239 = vsel %vm237, %v238, %v236
        %v240 = vshrl.u32 %v239, 3
        %v241 = vand.u32 %v239, 7
        %v242 = vsub.s32 0, %v241
        %v243 = vsel %vm237, %v242, %v241
        %vm244 = vcmp.ne.s32.totalorder %v243, 0
        %vm245 = vcmp.lt.s32.totalorder %v243, 0
        %vm246 = vmand %vm245, %vm244
        %v247 = vadd.s32 %v243, 8
        %v248 = vsel %vm246, %v247, %v243
        %vm249 = vcmp.eq.s32.totalorder %v163, %v165
        %v250 = vsel %vm249, 1, 0
        %v251 = vcvt.s32.f32 %v250
        %v252 = vrot.slane %v232, 1
        %v253 = vperm.slane %v232, 0
        %v254 = vperm.slane %v252, 0
        %vm255 = vcmp.eq.s32.totalorder %v163, %v253
        %vm256 = vcmp.eq.s32.totalorder %v163, %v254
        %v257 = vsel %vm255, 1, 0
        %v258 = vsel %vm256, 1, 0
        %v259 = vcvt.s32.f32 %v257
        %v260 = vcvt.s32.f32 %v258
        %v261 = vrot.slane %v248, 1
        %v262 = vperm.slane %v248, 0
        %v263 = vperm.slane %v261, 0
        %vm264 = vcmp.eq.s32.totalorder %v163, %v262
        %vm265 = vcmp.eq.s32.totalorder %v163, %v263
        %v266 = vsel %vm264, 1, 0
        %v267 = vsel %vm265, 1, 0
        %v268 = vcvt.s32.f32 %v266
        %v269 = vcvt.s32.f32 %v267
        %v270 = vmul.f32 %v160, %v251
        %v271 = vmul.f32 %v161, %v251
        %v272 = vsub.f32 1.0, %v160
        %v273 = vsub.f32 1.0, %v161
        %v274 = vmul.f32 %v272, 0.5
        %v275 = vmul.f32 %v273, 0.5
        %v276 = vadd.f32 %v259, %v268
        %v277 = vadd.f32 %v260, %v269
        %v278 = vmul.f32 %v274, %v276
        %v279 = vmul.f32 %v275, %v277
        %v280 = vadd.f32 %v270, %v278
        %v281 = vadd.f32 %v271, %v279
        %v283 = vsel %vm141, %v139, 0
        %285 = vmatpush.msra.mxu0 0.0
        %286 = vmatpush.msra.mxu0 0.0
        %287 = vmatpush.msra.mxu0 0.0
        %288 = vmatpush.msra.mxu0 0.0
        %289 = vmatpush.msra.mxu0 0.0
        %290 = vmatpush.msra.mxu0 0.0
        %291 = vmatpush.msra.mxu0 0.0
        %292 = vmatpush.msra.mxu0 0.0
        %293 = vmatpush.msra.mxu0 0.0
        %294 = vmatpush.msra.mxu0 0.0
        %295 = vmatpush.msra.mxu0 0.0
        %296 = vmatpush.msra.mxu0 0.0
        %297 = vmatpush.msra.mxu0 0.0
        %298 = vmatpush.msra.mxu0 0.0
        %299 = vmatpush.msra.mxu0 0.0
        %300 = vmatpush.msra.mxu0 %v280
        %301 = vmatmul.f32.gmra.mxu0 %v283
        %v302 = vpop.f32.mrf.mxu0
        %v303 = vadd.f32 0.0, %v302
        %304 = vdwg.mxu0
        %v306 = vsel %vm141, %v140, 0
        %308 = vmatpush.msra.mxu0 0.0
        %309 = vmatpush.msra.mxu0 0.0
        %310 = vmatpush.msra.mxu0 0.0
        %311 = vmatpush.msra.mxu0 0.0
        %312 = vmatpush.msra.mxu0 0.0
        %313 = vmatpush.msra.mxu0 0.0
        %314 = vmatpush.msra.mxu0 0.0
        %315 = vmatpush.msra.mxu0 0.0
        %316 = vmatpush.msra.mxu0 0.0
        %317 = vmatpush.msra.mxu0 0.0
        %318 = vmatpush.msra.mxu0 0.0
        %319 = vmatpush.msra.mxu0 0.0
        %320 = vmatpush.msra.mxu0 0.0
        %321 = vmatpush.msra.mxu0 0.0
        %322 = vmatpush.msra.mxu0 0.0
        %323 = vmatpush.msra.mxu0 %v281
        %324 = vmatmul.f32.gmra.mxu0 %v306
        %v325 = vpop.f32.mrf.mxu0
        %v326 = vadd.f32 0.0, %v325
        %327 = vdwg.mxu0
        %328 = vst.msk [vmem:[%s136] sm:$0xff] %vm141, %v303
        %329 = vst.msk [vmem:[%s136 + $0x8] sm:$0xff] %vm141, %v326
        %s330 = sand.u32 %s52, 1
        %s331 = scalar_lea.sflag [#allocation4], %s330
        %s332 = sand.u32 %s52, 1
        %s333 = smul.addr %s332, 16
        %s334 = scalar_lea.vmem [#allocation5], %s333
        // Predicated region
        $region29: #{tpu_custom_call.1} parent=23 // pred_check
          %p335 = pneg %p62
        $region30: #{tpu_custom_call.1} parent=23 // pred_check_branch
          %337 = sbr.rel (%p335) target = $region32
        $region31: #{tpu_custom_call.1} parent=23 // pred_region
          %s338 = smul.u32 2, %s18
          %340 = vsyncadd %s331, 0
          %s341 = smul.addr %s338, 8
          %s342 = scalar_lea.hbm %s1, %s341
          %s343 = sshll.u32 %s334, 4
          %s344 = int_to_ptr.vmem [resolvable:$true] %s343
          %s345 = sshll.u32 %s342, 4
          %s346 = int_to_ptr.hbm [resolvable:$true] %s345
          %351 = dma.vmem_to_hbm [thread:$0]  %s344, 256, %s346, %s331, 128, 128, 8
        $region32: #{tpu_custom_call.1} parent=23 // pred_fallthru
          _
      $region24: #{tpu_custom_call.1} parent=5 // pred_fallthru
        _
      %p352 = scmp.le.s32.totalorder 2, %s13
      // Predicated region
      $region33: #{tpu_custom_call.1} parent=5 // pred_check
        %p353 = pneg %p352
      $region34: #{tpu_custom_call.1} parent=5 // pred_check_branch
        %355 = sbr.rel (%p353) target = $region36
      $region35: #{tpu_custom_call.1} parent=5 // pred_region
        %s356 = ssub.s32 %s13, 2
        // Predicated region
        $region37: #{tpu_custom_call.1} parent=35 // pred_check
          %p357 = pneg %p68
        $region38: #{tpu_custom_call.1} parent=35 // pred_check_branch
          %359 = sbr.rel (%p357) target = $region40
        $region39: #{tpu_custom_call.1} parent=35 // pred_region
          %s360 = sand.u32 %s53, 1
          %s361 = scalar_lea.sflag [#allocation4], %s360
          %s362 = sand.u32 %s53, 1
          %s363 = smul.addr %s362, 16
          %s364 = scalar_lea.vmem [#allocation5], %s363
          %366 = dma.done %s361, 256
        $region40: #{tpu_custom_call.1} parent=35 // pred_fallthru
          _
      $region36: #{tpu_custom_call.1} parent=5 // pred_fallthru
        _
    $region6: #{tpu_custom_call.1} parent=1 // loop_footer
      %s17 = sadd.s32 1, %s13
    $region7: #{tpu_custom_call.1} parent=1 // loop_footer_branch
      %12 = sbr.rel target = $region3
    $region8: #{tpu_custom_call.1} parent=1 // loop_exit
      _
    %367 = vsyncpa [#allocation3], 1
    %s368 = scalar_lea.sflag [#allocation3], 1
    %369 = vsyncpa %s368, 1
    %370 = vsyncpa [#allocation4], 1
    %s371 = scalar_lea.sflag [#allocation4], 1
    %372 = vsyncpa %s371, 1

</llo_original>
